<compile_context>
chip_gen: v5e
topology: v5e:2x2
jax: 0.10.0
libtpu: 0.0.40
codegen_flags: <defaults>
</compile_context>

<pallas_src>
import numpy as np
import jax
import jax.numpy as jnp
from jax.experimental import pallas as pl
from jax.experimental.pallas import tpu as pltpu

NOISE = 0.125   # module-level `noise` in the reference code
LANES = 128

# Persistent MLS shift register (mirrors the torch module's global
# prng_shift_reg: starts at all-ones, advances across forward calls).
_PRNG_STATE = [1, 1, 1, 1]


def _mls_prng_draws(n_draws, state=None, nbits=4):
    """Reproduce repeated scipy.signal.max_len_seq(4, state, length=1) calls.

    If state is None, uses (and advances) the module-level persistent shift
    register, matching the torch module's persistent prng_shift_reg behavior.
    Returns 2*bit - 1 per draw as float32 (pure host scalar work).
    """
    global _PRNG_STATE
    st = list(_PRNG_STATE if state is None else state)
    taps = (3,)  # scipy's taps for nbits=4
    draws = []
    for _ in range(n_draws):
        fb = st[0]
        draws.append(2.0 * fb - 1.0)
        for t in taps:
            fb ^= st[t % nbits]
        st[0] = fb
        st = st[1:] + st[:1]  # np.roll(state, -1)
    if state is None:
        _PRNG_STATE = st
    return np.asarray(draws, dtype=np.float32)


# ----------------------------------------------------------------------------
# Tiling helpers
# ----------------------------------------------------------------------------
def _vmem_capacity_bytes():
    """Physical VMEM of the current chip; conservative 64 MiB (v7x) fallback."""
    try:
        info = pltpu.get_tpu_info()
        return int(getattr(info, "vmem_capacity_bytes", 64 << 20))
    except Exception:
        return 64 << 20


def _sublane_granularity(dtype):
    """Min second-minor block multiple: 8 (f32), 16 (bf16), 32 (int8/fp8)."""
    itemsize = np.dtype(dtype).itemsize
    return max(8, 32 // max(1, itemsize))


def _max_block_rows(in_itemsize, out_itemsize):
    """Largest block-row count whose double-buffered 6-stream footprint stays
    within ~1/4 of physical VMEM (v5e/v6e: 4096 rows; v7x: ~2700 rows)."""
    vmem = _vmem_capacity_bytes()
    per_row = 2 * LANES * 3 * (in_itemsize + out_itemsize)  # 2 bufs, 3 in + 3 out
    mbr = (vmem // 4) // per_row
    return int(max(256, min(4096, mbr)))


def _choose_block_rows(rows, gran, max_block_rows, target_blocks=8):
    """Pick block rows TR (multiple of `gran`, <= max_block_rows).

    Aims for >= target_blocks grid steps (>= 4 per TensorCore on v7x, so the
    auto-pipeline always has a next block to prefetch) whenever the data is
    large enough, while otherwise keeping blocks as large as the VMEM budget
    allows.
    """
    mbr = max(gran, (max_block_rows // gran) * gran)
    if rows <= gran * target_blocks:
        return gran
    tr = (rows // target_blocks // gran) * gran
    return max(gran, min(mbr, tr))


# ----------------------------------------------------------------------------
# Kernel
# ----------------------------------------------------------------------------
def _triangle3_kernel(w_ref, x0_ref, x1_ref, x2_ref, o0_ref, o1_ref, o2_ref):
    # w_ref: (3, 8) effective LUT weights in SMEM (scalar reads).
    # x*_ref: (TR, 128) VMEM tiles (native input dtype); o*_ref: out_dtype tiles.

    # Hoisted sign tests: one compare per input per block.
    b0 = x0_ref[...] > 0
    b1 = x1_ref[...] > 0
    b2 = x2_ref[...] > 0

    # Hoist all 24 SMEM scalar weight reads to the kernel top (splatted once
    # per block by the compiler; minimal 7-select tree keeps v7x VALU slack).
    w = [[w_ref[l, i] for i in range(8)] for l in range(3)]
    out_dtype = o0_ref.dtype

    def lut3(wl, a, b, c):
        # out = wl[ 4*c + 2*b + a ]  with a/b/c boolean (x > 0): the nested
        # Mux tree of the reference (mode=True) as exactly 7 selects.
        lo = jnp.where(b, jnp.where(a, wl[3], wl[2]), jnp.where(a, wl[1], wl[0]))
        hi = jnp.where(b, jnp.where(a, wl[7], wl[6]), jnp.where(a, wl[5], wl[4]))
        return jnp.where(c, hi, lo).astype(out_dtype)

    o0_ref[...] = lut3(w[0], b1, b2, b0)
    o1_ref[...] = lut3(w[1], b0, b2, b1)
    o2_ref[...] = lut3(w[2], b0, b1, b2)


# ----------------------------------------------------------------------------
# Wrapper
# ----------------------------------------------------------------------------
def triangle3_forward(weights, x0, x1, x2, noise=NOISE, out_dtype=jnp.float32):
    """weights: (3, 8) raw LUT3 weights (3 LUTs x 8 entries, as in __init__)."""
    # Fold the prng()/noise perturbation into effective weights entirely in
    # NumPy (no extra XLA dispatch / device round-trip for 24 scalars).
    draws = _mls_prng_draws(24).reshape(3, 8)
    w_np = np.asarray(weights, dtype=np.float32)
    w_eff = np.asarray(
        w_np + np.abs(1.0 - np.abs(w_np)) * draws * np.float32(noise),
        dtype=np.float32,
    )

    orig_shape = x0.shape
    in_dtype = x0.dtype
    total = int(np.prod(orig_shape)) if len(orig_shape) else 1

    in_itemsize = np.dtype(in_dtype).itemsize
    out_itemsize = np.dtype(out_dtype).itemsize
    gran = max(_sublane_granularity(in_dtype), _sublane_granularity(out_dtype))

    aligned = (total % LANES == 0) and total > 0
    if aligned:
        # Zero-copy path: contiguous reshape to a lane-dense (rows, 128) view;
        # ragged row counts vs. the block size are masked by Pallas.
        rows = total // LANES
        padded_total = total

        def prep(x):
            return x.reshape(rows, LANES)
    else:
        # Rare fallback for non-128-divisible sizes: pad by < 128 elements.
        # TODO(synk): a ragged rank-1 block layout would make this zero-copy
        # too; kept off the hot path for lowering robustness.
        rows = -(-total // LANES)
        padded_total = rows * LANES

        def prep(x):
            f = x.reshape(-1)
            return jnp.pad(f, (0, padded_total - total)).reshape(rows, LANES)

    f0, f1, f2 = prep(x0), prep(x1), prep(x2)

    max_rows = _max_block_rows(in_itemsize, out_itemsize)
    tr = _choose_block_rows(rows, gran, max_rows)
    grid = (pl.cdiv(rows, tr),)

    xspec = pl.BlockSpec((tr, LANES), lambda i: (i, 0))
    out_shape = tuple(
        jax.ShapeDtypeStruct((rows, LANES), out_dtype) for _ in range(3)
    )

    # Double-buffered VMEM footprint + headroom; never let the scoped default
    # cap the block size we chose (stays <= half of physical VMEM).
    footprint = 2 * tr * LANES * 3 * (in_itemsize + out_itemsize)
    vmem_limit = int(
        min(_vmem_capacity_bytes() // 2, max(32 << 20, footprint + (8 << 20)))
    )

    cost = pl.CostEstimate(
        flops=30 * padded_total,
        transcendentals=0,
        bytes_accessed=3 * padded_total * in_itemsize
        + 3 * padded_total * out_itemsize,
    )

    o0, o1, o2 = pl.pallas_call(
        _triangle3_kernel,
        grid=grid,
        in_specs=[
            pl.BlockSpec(memory_space=pltpu.MemorySpace.SMEM),  # (3,8) weights
            xspec,
            xspec,
            xspec,
        ],
        out_specs=(xspec, xspec, xspec),
        out_shape=out_shape,
        compiler_params=pltpu.CompilerParams(
            dimension_semantics=("parallel",),
            vmem_limit_bytes=vmem_limit,
        ),
        cost_estimate=cost,
    )(w_eff, f0, f1, f2)

    def unprep(o):
        if aligned:
            return o.reshape(orig_shape)
        return o.reshape(-1)[:total].reshape(orig_shape)

    return [unprep(o0), unprep(o1), unprep(o2)]


# ----------------------------------------------------------------------------
# Self-test
# ----------------------------------------------------------------------------
if __name__ == "__main__":
    key = jax.random.PRNGKey(0)
    k0, k1, k2, kw = jax.random.split(key, 4)
    shape = (2, 4, 16, 16)  # NCHW, 2*4*16*16 = 2048 elements per input
    x0 = jax.random.normal(k0, shape, dtype=jnp.float32)
    x1 = jax.random.normal(k1, shape, dtype=jnp.float32)
    x2 = jax.random.normal(k2, shape, dtype=jnp.float32)

    # LUT3.__init__ uses torch.zeros(8) per LUT (shape (3, 8) total); here we
    # use small deterministic non-zero values so the LUT selection is visible.
    weights = 0.5 * jax.random.uniform(
        kw, (3, 8), minval=-1.0, maxval=1.0, dtype=jnp.float32
    )
    w_host = np.asarray(weights, dtype=np.float32)

    # Replay the MLS sequence for the references without touching the live
    # persistent state (forward #1 consumes draws[:24], forward #2 the next 24).
    all_draws = _mls_prng_draws(48, state=[1, 1, 1, 1])

    def ref_forward(draws24, xs):
        w_eff = w_host + np.abs(1.0 - np.abs(w_host)) * draws24.reshape(3, 8) * NOISE

        def lut(l, a, b, c):
            idx = (
                4 * (np.asarray(c) > 0).astype(np.int32)
                + 2 * (np.asarray(b) > 0).astype(np.int32)
                + (np.asarray(a) > 0).astype(np.int32)
            )
            return w_eff[l][idx]

        a0, a1, a2 = [np.asarray(x) for x in xs]
        return [lut(0, a1, a2, a0), lut(1, a0, a2, a1), lut(2, a0, a1, a2)]

    # Forward 1: 128-divisible size -> zero-copy (rows, 128) path.
    outs = triangle3_forward(weights, x0, x1, x2, NOISE)
    outs = [jax.block_until_ready(o) for o in outs]
    refs = ref_forward(all_draws[:24], (x0, x1, x2))
    for o, r in zip(outs, refs):
        np.testing.assert_allclose(np.asarray(o), r, rtol=1e-6, atol=1e-6)

    # Forward 2: non-128-divisible size -> padded fallback path (also checks
    # the persistent PRNG state advanced correctly across forwards).
    shape2 = (3, 5, 11)
    y0 = jax.random.normal(jax.random.PRNGKey(1), shape2, dtype=jnp.float32)
    y1 = jax.random.normal(jax.random.PRNGKey(2), shape2, dtype=jnp.float32)
    y2 = jax.random.normal(jax.random.PRNGKey(3), shape2, dtype=jnp.float32)
    outs2 = triangle3_forward(weights, y0, y1, y2, NOISE)
    outs2 = [jax.block_until_ready(o) for o in outs2]
    refs2 = ref_forward(all_draws[24:48], (y0, y1, y2))
    for o, r in zip(outs2, refs2):
        np.testing.assert_allclose(np.asarray(o), r, rtol=1e-6, atol=1e-6)

    print("KERNEL_OK")
</pallas_src>

<mosaic_0001>
module attributes {stable_mosaic.version = 11 : i64} {
  func.func @_triangle3_kernel(%arg0: i32, %arg1: memref<3x8xf32, #tpu.memory_space<smem>>, %arg2: memref<8x128xf32, #tpu.memory_space<vmem>>, %arg3: memref<8x128xf32, #tpu.memory_space<vmem>>, %arg4: memref<8x128xf32, #tpu.memory_space<vmem>>, %arg5: memref<8x128xf32, #tpu.memory_space<vmem>>, %arg6: memref<8x128xf32, #tpu.memory_space<vmem>>, %arg7: memref<8x128xf32, #tpu.memory_space<vmem>>) attributes {dimension_semantics = [#tpu.dimension_semantics<parallel>], iteration_bounds = array<i64: 2>, scalar_prefetch = 0 : i64, scratch_operands = 0 : i64, tpu.core_type = #tpu.core_type<tc>, window_params = [{transform_indices = @transform_0, window_bounds = array<i64: 3, 8>}, {transform_indices = @transform_1, window_bounds = array<i64: 8, 128>}, {transform_indices = @transform_2, window_bounds = array<i64: 8, 128>}, {transform_indices = @transform_3, window_bounds = array<i64: 8, 128>}, {transform_indices = @transform_4, window_bounds = array<i64: 8, 128>}, {transform_indices = @transform_5, window_bounds = array<i64: 8, 128>}, {transform_indices = @transform_6, window_bounds = array<i64: 8, 128>}]} {
    %c0 = arith.constant 0 : index
    %c0_0 = arith.constant 0 : index
    %0 = vector.load %arg2[%c0, %c0_0] : memref<8x128xf32, #tpu.memory_space<vmem>>, vector<8x128xf32>
    %cst = arith.constant 0.000000e+00 : f32
    %1 = vector.broadcast %cst : f32 to vector<8x128xf32>
    %2 = arith.cmpf ogt, %0, %1 : vector<8x128xf32>
    %c0_1 = arith.constant 0 : index
    %c0_2 = arith.constant 0 : index
    %3 = vector.load %arg3[%c0_1, %c0_2] : memref<8x128xf32, #tpu.memory_space<vmem>>, vector<8x128xf32>
    %cst_3 = arith.constant 0.000000e+00 : f32
    %4 = vector.broadcast %cst_3 : f32 to vector<8x128xf32>
    %5 = arith.cmpf ogt, %3, %4 : vector<8x128xf32>
    %c0_4 = arith.constant 0 : index
    %c0_5 = arith.constant 0 : index
    %6 = vector.load %arg4[%c0_4, %c0_5] : memref<8x128xf32, #tpu.memory_space<vmem>>, vector<8x128xf32>
    %cst_6 = arith.constant 0.000000e+00 : f32
    %7 = vector.broadcast %cst_6 : f32 to vector<8x128xf32>
    %8 = arith.cmpf ogt, %6, %7 : vector<8x128xf32>
    %c0_7 = arith.constant 0 : index
    %c0_8 = arith.constant 0 : index
    %9 = memref.load %arg1[%c0_7, %c0_8] : memref<3x8xf32, #tpu.memory_space<smem>>
    %c0_9 = arith.constant 0 : index
    %c1 = arith.constant 1 : index
    %10 = memref.load %arg1[%c0_9, %c1] : memref<3x8xf32, #tpu.memory_space<smem>>
    %c0_10 = arith.constant 0 : index
    %c2 = arith.constant 2 : index
    %11 = memref.load %arg1[%c0_10, %c2] : memref<3x8xf32, #tpu.memory_space<smem>>
    %c0_11 = arith.constant 0 : index
    %c3 = arith.constant 3 : index
    %12 = memref.load %arg1[%c0_11, %c3] : memref<3x8xf32, #tpu.memory_space<smem>>
    %c0_12 = arith.constant 0 : index
    %c4 = arith.constant 4 : index
    %13 = memref.load %arg1[%c0_12, %c4] : memref<3x8xf32, #tpu.memory_space<smem>>
    %c0_13 = arith.constant 0 : index
    %c5 = arith.constant 5 : index
    %14 = memref.load %arg1[%c0_13, %c5] : memref<3x8xf32, #tpu.memory_space<smem>>
    %c0_14 = arith.constant 0 : index
    %c6 = arith.constant 6 : index
    %15 = memref.load %arg1[%c0_14, %c6] : memref<3x8xf32, #tpu.memory_space<smem>>
    %c0_15 = arith.constant 0 : index
    %c7 = arith.constant 7 : index
    %16 = memref.load %arg1[%c0_15, %c7] : memref<3x8xf32, #tpu.memory_space<smem>>
    %c1_16 = arith.constant 1 : index
    %c0_17 = arith.constant 0 : index
    %17 = memref.load %arg1[%c1_16, %c0_17] : memref<3x8xf32, #tpu.memory_space<smem>>
    %c1_18 = arith.constant 1 : index
    %c1_19 = arith.constant 1 : index
    %18 = memref.load %arg1[%c1_18, %c1_19] : memref<3x8xf32, #tpu.memory_space<smem>>
    %c1_20 = arith.constant 1 : index
    %c2_21 = arith.constant 2 : index
    %19 = memref.load %arg1[%c1_20, %c2_21] : memref<3x8xf32, #tpu.memory_space<smem>>
    %c1_22 = arith.constant 1 : index
    %c3_23 = arith.constant 3 : index
    %20 = memref.load %arg1[%c1_22, %c3_23] : memref<3x8xf32, #tpu.memory_space<smem>>
    %c1_24 = arith.constant 1 : index
    %c4_25 = arith.constant 4 : index
    %21 = memref.load %arg1[%c1_24, %c4_25] : memref<3x8xf32, #tpu.memory_space<smem>>
    %c1_26 = arith.constant 1 : index
    %c5_27 = arith.constant 5 : index
    %22 = memref.load %arg1[%c1_26, %c5_27] : memref<3x8xf32, #tpu.memory_space<smem>>
    %c1_28 = arith.constant 1 : index
    %c6_29 = arith.constant 6 : index
    %23 = memref.load %arg1[%c1_28, %c6_29] : memref<3x8xf32, #tpu.memory_space<smem>>
    %c1_30 = arith.constant 1 : index
    %c7_31 = arith.constant 7 : index
    %24 = memref.load %arg1[%c1_30, %c7_31] : memref<3x8xf32, #tpu.memory_space<smem>>
    %c2_32 = arith.constant 2 : index
    %c0_33 = arith.constant 0 : index
    %25 = memref.load %arg1[%c2_32, %c0_33] : memref<3x8xf32, #tpu.memory_space<smem>>
    %c2_34 = arith.constant 2 : index
    %c1_35 = arith.constant 1 : index
    %26 = memref.load %arg1[%c2_34, %c1_35] : memref<3x8xf32, #tpu.memory_space<smem>>
    %c2_36 = arith.constant 2 : index
    %c2_37 = arith.constant 2 : index
    %27 = memref.load %arg1[%c2_36, %c2_37] : memref<3x8xf32, #tpu.memory_space<smem>>
    %c2_38 = arith.constant 2 : index
    %c3_39 = arith.constant 3 : index
    %28 = memref.load %arg1[%c2_38, %c3_39] : memref<3x8xf32, #tpu.memory_space<smem>>
    %c2_40 = arith.constant 2 : index
    %c4_41 = arith.constant 4 : index
    %29 = memref.load %arg1[%c2_40, %c4_41] : memref<3x8xf32, #tpu.memory_space<smem>>
    %c2_42 = arith.constant 2 : index
    %c5_43 = arith.constant 5 : index
    %30 = memref.load %arg1[%c2_42, %c5_43] : memref<3x8xf32, #tpu.memory_space<smem>>
    %c2_44 = arith.constant 2 : index
    %c6_45 = arith.constant 6 : index
    %31 = memref.load %arg1[%c2_44, %c6_45] : memref<3x8xf32, #tpu.memory_space<smem>>
    %c2_46 = arith.constant 2 : index
    %c7_47 = arith.constant 7 : index
    %32 = memref.load %arg1[%c2_46, %c7_47] : memref<3x8xf32, #tpu.memory_space<smem>>
    %33 = vector.broadcast %12 : f32 to vector<8x128xf32>
    %34 = vector.broadcast %11 : f32 to vector<8x128xf32>
    %35 = arith.select %5, %33, %34 : vector<8x128xi1>, vector<8x128xf32>
    %36 = vector.broadcast %10 : f32 to vector<8x128xf32>
    %37 = vector.broadcast %9 : f32 to vector<8x128xf32>
    %38 = arith.select %5, %36, %37 : vector<8x128xi1>, vector<8x128xf32>
    %39 = arith.select %8, %35, %38 : vector<8x128xi1>, vector<8x128xf32>
    %40 = vector.broadcast %16 : f32 to vector<8x128xf32>
    %41 = vector.broadcast %15 : f32 to vector<8x128xf32>
    %42 = arith.select %5, %40, %41 : vector<8x128xi1>, vector<8x128xf32>
    %43 = vector.broadcast %14 : f32 to vector<8x128xf32>
    %44 = vector.broadcast %13 : f32 to vector<8x128xf32>
    %45 = arith.select %5, %43, %44 : vector<8x128xi1>, vector<8x128xf32>
    %46 = arith.select %8, %42, %45 : vector<8x128xi1>, vector<8x128xf32>
    %47 = arith.select %2, %46, %39 : vector<8x128xi1>, vector<8x128xf32>
    %c0_48 = arith.constant 0 : index
    %c0_49 = arith.constant 0 : index
    %48 = vector.load %arg5[%c0_48, %c0_49] : memref<8x128xf32, #tpu.memory_space<vmem>>, vector<8x128xf32>
    tpu.vector_store %arg5[%c0_48, %c0_49], %47 {strides = array<i32>} : memref<8x128xf32, #tpu.memory_space<vmem>>, vector<8x128xf32>,
    %49 = vector.broadcast %20 : f32 to vector<8x128xf32>
    %50 = vector.broadcast %19 : f32 to vector<8x128xf32>
    %51 = arith.select %2, %49, %50 : vector<8x128xi1>, vector<8x128xf32>
    %52 = vector.broadcast %18 : f32 to vector<8x128xf32>
    %53 = vector.broadcast %17 : f32 to vector<8x128xf32>
    %54 = arith.select %2, %52, %53 : vector<8x128xi1>, vector<8x128xf32>
    %55 = arith.select %8, %51, %54 : vector<8x128xi1>, vector<8x128xf32>
    %56 = vector.broadcast %24 : f32 to vector<8x128xf32>
    %57 = vector.broadcast %23 : f32 to vector<8x128xf32>
    %58 = arith.select %2, %56, %57 : vector<8x128xi1>, vector<8x128xf32>
    %59 = vector.broadcast %22 : f32 to vector<8x128xf32>
    %60 = vector.broadcast %21 : f32 to vector<8x128xf32>
    %61 = arith.select %2, %59, %60 : vector<8x128xi1>, vector<8x128xf32>
    %62 = arith.select %8, %58, %61 : vector<8x128xi1>, vector<8x128xf32>
    %63 = arith.select %5, %62, %55 : vector<8x128xi1>, vector<8x128xf32>
    %c0_50 = arith.constant 0 : index
    %c0_51 = arith.constant 0 : index
    %64 = vector.load %arg6[%c0_50, %c0_51] : memref<8x128xf32, #tpu.memory_space<vmem>>, vector<8x128xf32>
    tpu.vector_store %arg6[%c0_50, %c0_51], %63 {strides = array<i32>} : memref<8x128xf32, #tpu.memory_space<vmem>>, vector<8x128xf32>,
    %65 = vector.broadcast %28 : f32 to vector<8x128xf32>
    %66 = vector.broadcast %27 : f32 to vector<8x128xf32>
    %67 = arith.select %2, %65, %66 : vector<8x128xi1>, vector<8x128xf32>
    %68 = vector.broadcast %26 : f32 to vector<8x128xf32>
    %69 = vector.broadcast %25 : f32 to vector<8x128xf32>
    %70 = arith.select %2, %68, %69 : vector<8x128xi1>, vector<8x128xf32>
    %71 = arith.select %5, %67, %70 : vector<8x128xi1>, vector<8x128xf32>
    %72 = vector.broadcast %32 : f32 to vector<8x128xf32>
    %73 = vector.broadcast %31 : f32 to vector<8x128xf32>
    %74 = arith.select %2, %72, %73 : vector<8x128xi1>, vector<8x128xf32>
    %75 = vector.broadcast %30 : f32 to vector<8x128xf32>
    %76 = vector.broadcast %29 : f32 to vector<8x128xf32>
    %77 = arith.select %2, %75, %76 : vector<8x128xi1>, vector<8x128xf32>
    %78 = arith.select %5, %74, %77 : vector<8x128xi1>, vector<8x128xf32>
    %79 = arith.select %8, %78, %71 : vector<8x128xi1>, vector<8x128xf32>
    %c0_52 = arith.constant 0 : index
    %c0_53 = arith.constant 0 : index
    %80 = vector.load %arg7[%c0_52, %c0_53] : memref<8x128xf32, #tpu.memory_space<vmem>>, vector<8x128xf32>
    tpu.vector_store %arg7[%c0_52, %c0_53], %79 {strides = array<i32>} : memref<8x128xf32, #tpu.memory_space<vmem>>, vector<8x128xf32>,
    return
  }
  func.func @transform_0(%arg0: i32) -> (i32, i32) {
    %c0_i32 = arith.constant 0 : i32
    %c0_i32_0 = arith.constant 0 : i32
    %c0_i32_1 = arith.constant 0 : i32
    return %c0_i32, %c0_i32_0 : i32, i32
  }
  func.func @transform_1(%arg0: i32) -> (i32, i32) {
    %c0_i32 = arith.constant 0 : i32
    %c0_i32_0 = arith.constant 0 : i32
    return %arg0, %c0_i32 : i32, i32
  }
  func.func @transform_2(%arg0: i32) -> (i32, i32) {
    %c0_i32 = arith.constant 0 : i32
    %c0_i32_0 = arith.constant 0 : i32
    return %arg0, %c0_i32 : i32, i32
  }
  func.func @transform_3(%arg0: i32) -> (i32, i32) {
    %c0_i32 = arith.constant 0 : i32
    %c0_i32_0 = arith.constant 0 : i32
    return %arg0, %c0_i32 : i32, i32
  }
  func.func @transform_4(%arg0: i32) -> (i32, i32) {
    %c0_i32 = arith.constant 0 : i32
    %c0_i32_0 = arith.constant 0 : i32
    return %arg0, %c0_i32 : i32, i32
  }
  func.func @transform_5(%arg0: i32) -> (i32, i32) {
    %c0_i32 = arith.constant 0 : i32
    %c0_i32_0 = arith.constant 0 : i32
    return %arg0, %c0_i32 : i32, i32
  }
  func.func @transform_6(%arg0: i32) -> (i32, i32) {
    %c0_i32 = arith.constant 0 : i32
    %c0_i32_0 = arith.constant 0 : i32
    return %arg0, %c0_i32 : i32, i32
  }
}

</mosaic_0001>

<llo_original>
// kernel: tpu_custom_call.1
$region0: #{tpu_custom_call.1}
  #allocation0 [shape = 'u32[]', space=smem, size = 0x4, offset = 0x4, fixed_abs, tag = 'smem constant byte address 0x4 - core index']
  #allocation1 [shape = 'u32[72,128]{1,0:T(1,128)}', space=vmem, size = 0x9000, scoped, tag = 'internal scratch']
  %s0 = inlined_call_operand.hbm [shape: f32[3,8], index: 0, kind: input, shape index: {}]
  %s1 = inlined_call_operand.hbm [shape: f32[16,128], index: 1, kind: input, shape index: {}]
  %s2 = inlined_call_operand.hbm [shape: f32[16,128], index: 2, kind: input, shape index: {}]
  %s3 = inlined_call_operand.hbm [shape: f32[16,128], index: 3, kind: input, shape index: {}]
  %s4 = inlined_call_operand.hbm [shape: f32[16,128], index: 4, kind: output, shape index: {0}]
  %s5 = inlined_call_operand.hbm [shape: f32[16,128], index: 5, kind: output, shape index: {1}]
  %s6 = inlined_call_operand.hbm [shape: f32[16,128], index: 6, kind: output, shape index: {2}]
  %7 = xla_tuple %s4, %s5, %s6
  %s8 = sld [smem:[#allocation0]]
  $region81: #{tpu_custom_call.1} parent=0
    _
  %s10 = ssub.s32 1, %s8
  %s11 = scalar_select 0, %s10, %s8
  $region1: #{tpu_custom_call.1} parent=0
    #allocation2 [shape = 'u8[2048]{0}', space=smem, size = 0x800, scoped, tag = 'input window, operand 0, single buffered']
    #allocation3 [shape = 's32[2]{0}', space=sflag, size = 0x8, scoped, tag = 'scoped memory for tpu_custom_call.1']
    #allocation4 [shape = 's32[2]{0}', space=sflag, size = 0x8, scoped, tag = 'scoped memory for tpu_custom_call.1']
    #allocation5 [shape = 's32[2]{0}', space=sflag, size = 0x8, scoped, tag = 'scoped memory for tpu_custom_call.1']
    #allocation6 [shape = 'u8[8192]{0}', space=vmem, size = 0x2000, scoped, tag = 'input window, operand 1']
    #allocation7 [shape = 'u8[8192]{0}', space=vmem, size = 0x2000, scoped, tag = 'input window, operand 2']
    #allocation8 [shape = 's32[2]{0}', space=sflag, size = 0x8, scoped, tag = 'scoped memory for tpu_custom_call.1']
    #allocation9 [shape = 'u8[8192]{0}', space=vmem, size = 0x2000, scoped, tag = 'input window, operand 3']
    #allocation10 [shape = 'u8[8192]{0}', space=vmem, size = 0x2000, scoped, tag = 'output window, operand 0']
    #allocation11 [shape = 'u8[8192]{0}', space=vmem, size = 0x2000, scoped, tag = 'output window, operand 1']
    #allocation12 [shape = 's32[2]{0}', space=sflag, size = 0x8, scoped, tag = 'scoped memory for tpu_custom_call.1']
    #allocation13 [shape = 'u8[8192]{0}', space=vmem, size = 0x2000, scoped, tag = 'output window, operand 2']
    %12 = vsyncpa [#allocation5], 0
    %13 = vsyncpa [#allocation3], 0
    %s14 = scalar_lea.sflag [#allocation3], 1
    %15 = vsyncpa %s14, 0
    %16 = vsyncpa [#allocation8], 0
    %s17 = scalar_lea.sflag [#allocation8], 1
    %18 = vsyncpa %s17, 0
    %19 = vsyncpa [#allocation4], 0
    %s20 = scalar_lea.sflag [#allocation4], 1
    %21 = vsyncpa %s20, 0
    %22 = vsyncpa [#allocation12], 0
    %s23 = scalar_lea.sflag [#allocation12], 1
    %24 = vsyncpa %s23, 0
    loop: start=0, step=1, limit=4
    $region2: #{tpu_custom_call.1} parent=1 // loop_pre_header
      _
    $region3: #{tpu_custom_call.1} parent=1 // loop_header
      %s26 = sphi 0, %s30
      %p27 = scmp.ge.s32.totalorder %s26, 4
      %s34 = sphi 0, %s34
      %s36 = sphi 0, %s34
      %s37 = sphi 0, %s36
      %s51 = sphi 0, %s37
      %s57 = sphi 0, %s59
      %s60 = sphi 0, %s57
      %s61 = sphi 0, %s60
      %s77 = sphi 0, %s61
      %s83 = sphi 0, %s85
      %s86 = sphi 0, %s83
      %s87 = sphi 0, %s86
      %s103 = sphi 0, %s87
      %s109 = sphi 0, %s111
      %s112 = sphi 0, %s109
      %s113 = sphi 0, %s112
      %s129 = sphi 0, %s113
      %s135 = sphi 0, %s137
      %s138 = sphi 0, %s135
      %s139 = sphi 0, %s138
      %s155 = sphi 0, %s139
      %s161 = sphi 0, %s163
      %s164 = sphi 0, %s161
      %s165 = sphi 0, %s164
      %s181 = sphi 0, %s165
      %s187 = sphi 0, %s189
      %s190 = sphi 0, %s187
      %s191 = sphi 0, %s190
      %s207 = sphi 0, %s191
    $region4: #{tpu_custom_call.1} parent=1 // loop_header_branch
      %29 = sbr.rel (%p27) target = $region8
    $region5: #{tpu_custom_call.1} parent=1 // loop_body
      %s31 = ssub.s32 %s26, 1
      %s32 = ssub.s32 %s26, 2
      %s33 = sadd.s32 %s26, 1
      %s35 = sadd.s32 %s34, 1
      %p38 = scmp.eq.s32.totalorder %s26, 1
      %p39 = scmp.ne.s32.totalorder %s34, %s36
      %p40 = scmp.eq.s32.totalorder %s26, 0
      %p41 = por %p39, %p40
      %p42 = scmp.ne.s32.totalorder %s34, %s36
      %p43 = scmp.eq.s32.totalorder %s31, 1
      %p44 = por %p42, %p43
      %p45 = scmp.ne.s32.totalorder %s36, %s37
      %p46 = scmp.eq.s32.totalorder %s31, 0
      %p47 = por %p45, %p46
      %p48 = scmp.ne.s32.totalorder %s36, %s37
      %p49 = scmp.eq.s32.totalorder %s32, 1
      %p50 = por %p48, %p49
      %p52 = scmp.ne.s32.totalorder %s37, %s51
      %p53 = scmp.eq.s32.totalorder %s32, 0
      %p54 = por %p52, %p53
      %s55 = ssub.s32 %s26, %s33
      %p56 = scmp.eq.s32.totalorder %s55, 0
      %s58 = sadd.s32 %s57, 1
      %s59 = scalar_select %p56, %s57, %s58
      %p62 = pneg %p56
      %p63 = scmp.eq.s32.totalorder %s26, 1
      %p64 = por %p62, %p63
      %p65 = scmp.ne.s32.totalorder %s57, %s60
      %p66 = scmp.eq.s32.totalorder %s26, 0
      %p67 = por %p65, %p66
      %p68 = scmp.ne.s32.totalorder %s57, %s60
      %p69 = scmp.eq.s32.totalorder %s31, 1
      %p70 = por %p68, %p69
      %p71 = scmp.ne.s32.totalorder %s60, %s61
      %p72 = scmp.eq.s32.totalorder %s31, 0
      %p73 = por %p71, %p72
      %p74 = scmp.ne.s32.totalorder %s60, %s61
      %p75 = scmp.eq.s32.totalorder %s32, 1
      %p76 = por %p74, %p75
      %p78 = scmp.ne.s32.totalorder %s61, %s77
      %p79 = scmp.eq.s32.totalorder %s32, 0
      %p80 = por %p78, %p79
      %s81 = ssub.s32 %s26, %s33
      %p82 = scmp.eq.s32.totalorder %s81, 0
      %s84 = sadd.s32 %s83, 1
      %s85 = scalar_select %p82, %s83, %s84
      %p88 = pneg %p82
      %p89 = scmp.eq.s32.totalorder %s26, 1
      %p90 = por %p88, %p89
      %p91 = scmp.ne.s32.totalorder %s83, %s86
      %p92 = scmp.eq.s32.totalorder %s26, 0
      %p93 = por %p91, %p92
      %p94 = scmp.ne.s32.totalorder %s83, %s86
      %p95 = scmp.eq.s32.totalorder %s31, 1
      %p96 = por %p94, %p95
      %p97 = scmp.ne.s32.totalorder %s86, %s87
      %p98 = scmp.eq.s32.totalorder %s31, 0
      %p99 = por %p97, %p98
      %p100 = scmp.ne.s32.totalorder %s86, %s87
      %p101 = scmp.eq.s32.totalorder %s32, 1
      %p102 = por %p100, %p101
      %p104 = scmp.ne.s32.totalorder %s87, %s103
      %p105 = scmp.eq.s32.totalorder %s32, 0
      %p106 = por %p104, %p105
      %s107 = ssub.s32 %s26, %s33
      %p108 = scmp.eq.s32.totalorder %s107, 0
      %s110 = sadd.s32 %s109, 1
      %s111 = scalar_select %p108, %s109, %s110
      %p114 = pneg %p108
      %p115 = scmp.eq.s32.totalorder %s26, 1
      %p116 = por %p114, %p115
      %p117 = scmp.ne.s32.totalorder %s109, %s112
      %p118 = scmp.eq.s32.totalorder %s26, 0
      %p119 = por %p117, %p118
      %p120 = scmp.ne.s32.totalorder %s109, %s112
      %p121 = scmp.eq.s32.totalorder %s31, 1
      %p122 = por %p120, %p121
      %p123 = scmp.ne.s32.totalorder %s112, %s113
      %p124 = scmp.eq.s32.totalorder %s31, 0
      %p125 = por %p123, %p124
      %p126 = scmp.ne.s32.totalorder %s112, %s113
      %p127 = scmp.eq.s32.totalorder %s32, 1
      %p128 = por %p126, %p127
      %p130 = scmp.ne.s32.totalorder %s113, %s129
      %p131 = scmp.eq.s32.totalorder %s32, 0
      %p132 = por %p130, %p131
      %s133 = ssub.s32 %s26, %s33
      %p134 = scmp.eq.s32.totalorder %s133, 0
      %s136 = sadd.s32 %s135, 1
      %s137 = scalar_select %p134, %s135, %s136
      %p140 = pneg %p134
      %p141 = scmp.eq.s32.totalorder %s26, 1
      %p142 = por %p140, %p141
      %p143 = scmp.ne.s32.totalorder %s135, %s138
      %p144 = scmp.eq.s32.totalorder %s26, 0
      %p145 = por %p143, %p144
      %p146 = scmp.ne.s32.totalorder %s135, %s138
      %p147 = scmp.eq.s32.totalorder %s31, 1
      %p148 = por %p146, %p147
      %p149 = scmp.ne.s32.totalorder %s138, %s139
      %p150 = scmp.eq.s32.totalorder %s31, 0
      %p151 = por %p149, %p150
      %p152 = scmp.ne.s32.totalorder %s138, %s139
      %p153 = scmp.eq.s32.totalorder %s32, 1
      %p154 = por %p152, %p153
      %p156 = scmp.ne.s32.totalorder %s139, %s155
      %p157 = scmp.eq.s32.totalorder %s32, 0
      %p158 = por %p156, %p157
      %s159 = ssub.s32 %s26, %s33
      %p160 = scmp.eq.s32.totalorder %s159, 0
      %s162 = sadd.s32 %s161, 1
      %s163 = scalar_select %p160, %s161, %s162
      %p166 = pneg %p160
      %p167 = scmp.eq.s32.totalorder %s26, 1
      %p168 = por %p166, %p167
      %p169 = scmp.ne.s32.totalorder %s161, %s164
      %p170 = scmp.eq.s32.totalorder %s26, 0
      %p171 = por %p169, %p170
      %p172 = scmp.ne.s32.totalorder %s161, %s164
      %p173 = scmp.eq.s32.totalorder %s31, 1
      %p174 = por %p172, %p173
      %p175 = scmp.ne.s32.totalorder %s164, %s165
      %p176 = scmp.eq.s32.totalorder %s31, 0
      %p177 = por %p175, %p176
      %p178 = scmp.ne.s32.totalorder %s164, %s165
      %p179 = scmp.eq.s32.totalorder %s32, 1
      %p180 = por %p178, %p179
      %p182 = scmp.ne.s32.totalorder %s165, %s181
      %p183 = scmp.eq.s32.totalorder %s32, 0
      %p184 = por %p182, %p183
      %s185 = ssub.s32 %s26, %s33
      %p186 = scmp.eq.s32.totalorder %s185, 0
      %s188 = sadd.s32 %s187, 1
      %s189 = scalar_select %p186, %s187, %s188
      %p192 = pneg %p186
      %p193 = scmp.eq.s32.totalorder %s26, 1
      %p194 = por %p192, %p193
      %p195 = scmp.ne.s32.totalorder %s187, %s190
      %p196 = scmp.eq.s32.totalorder %s26, 0
      %p197 = por %p195, %p196
      %p198 = scmp.ne.s32.totalorder %s187, %s190
      %p199 = scmp.eq.s32.totalorder %s31, 1
      %p200 = por %p198, %p199
      %p201 = scmp.ne.s32.totalorder %s190, %s191
      %p202 = scmp.eq.s32.totalorder %s31, 0
      %p203 = por %p201, %p202
      %p204 = scmp.ne.s32.totalorder %s190, %s191
      %p205 = scmp.eq.s32.totalorder %s32, 1
      %p206 = por %p204, %p205
      %p208 = scmp.ne.s32.totalorder %s191, %s207
      %p209 = scmp.eq.s32.totalorder %s32, 0
      %p210 = por %p208, %p209
      %p211 = scmp.le.s32.totalorder 1, %s26
      %p212 = scmp.lt.s32.totalorder %s26, 3
      %p213 = pnand %p211, %p212
      %p214 = pneg %p213
      // Predicated region
      $region9: #{tpu_custom_call.1} parent=5 // pred_check
        _
      $region10: #{tpu_custom_call.1} parent=5 // pred_check_branch
        %216 = sbr.rel (%p213) target = $region12
      $region11: #{tpu_custom_call.1} parent=5 // pred_region
        %s217 = ssub.s32 %s26, 1
        // Predicated region
        $region13: #{tpu_custom_call.1} parent=11 // pred_check
          %p218 = pneg %p47
        $region14: #{tpu_custom_call.1} parent=11 // pred_check_branch
          %220 = sbr.rel (%p218) target = $region16
        $region15: #{tpu_custom_call.1} parent=11 // pred_region
          %222 = vsyncadd [#allocation5], 0
          %s224 = sshll.u32 %s0, 4
          %s225 = int_to_ptr.hbm [resolvable:$true] %s224
          %227 = dma.hbm_to_smem %s225, 64, [#allocation2], [#allocation5]
        $region16: #{tpu_custom_call.1} parent=11 // pred_fallthru
          _
      $region12: #{tpu_custom_call.1} parent=5 // pred_fallthru
        _
      %p228 = scmp.lt.s32.totalorder %s26, 2
      // Predicated region
      $region17: #{tpu_custom_call.1} parent=5 // pred_check
        %p229 = pneg %p228
      $region18: #{tpu_custom_call.1} parent=5 // pred_check_branch
        %231 = sbr.rel (%p229) target = $region20
      $region19: #{tpu_custom_call.1} parent=5 // pred_region
        // Predicated region
        $region21: #{tpu_custom_call.1} parent=19 // pred_check
          %p232 = pneg %p67
        $region22: #{tpu_custom_call.1} parent=19 // pred_check_branch
          %234 = sbr.rel (%p232) target = $region24
        $region23: #{tpu_custom_call.1} parent=19 // pred_region
          %s235 = sand.u32 %s57, 1
          %s236 = scalar_lea.sflag [#allocation3], %s235
          %s237 = sand.u32 %s57, 1
          %s238 = smul.addr %s237, 8
          %s239 = scalar_lea.vmem [#allocation6], %s238
          %241 = vsyncadd %s236, 0
          %s242 = smul.addr %s26, 8
          %s243 = scalar_lea.hbm %s1, %s242
          %s245 = sshll.u32 %s243, 4
          %s246 = int_to_ptr.hbm [resolvable:$true] %s245
          %s247 = sshll.u32 %s239, 4
          %s248 = int_to_ptr.vmem [resolvable:$true] %s247
          %250 = dma.hbm_to_vmem [thread:$0]  %s246, 128, %s248, %s236
        $region24: #{tpu_custom_call.1} parent=19 // pred_fallthru
          _
        // Predicated region
        $region25: #{tpu_custom_call.1} parent=19 // pred_check
          %p251 = pneg %p93
        $region26: #{tpu_custom_call.1} parent=19 // pred_check_branch
          %253 = sbr.rel (%p251) target = $region28
        $region27: #{tpu_custom_call.1} parent=19 // pred_region
          %s254 = sand.u32 %s26, 1
          %s255 = scalar_lea.sflag [#allocation8], %s254
          %s256 = sand.u32 %s83, 1
          %s257 = smul.addr %s256, 8
          %s258 = scalar_lea.vmem [#allocation7], %s257
          %260 = vsyncadd %s255, 0
          %s261 = smul.addr %s26, 8
          %s262 = scalar_lea.hbm %s2, %s261
          %s264 = sshll.u32 %s262, 4
          %s265 = int_to_ptr.hbm [resolvable:$true] %s264
          %s266 = sshll.u32 %s258, 4
          %s267 = int_to_ptr.vmem [resolvable:$true] %s266
          %269 = dma.hbm_to_vmem [thread:$0]  %s265, 128, %s267, %s255
        $region28: #{tpu_custom_call.1} parent=19 // pred_fallthru
          _
        // Predicated region
        $region29: #{tpu_custom_call.1} parent=19 // pred_check
          %p270 = pneg %p119
        $region30: #{tpu_custom_call.1} parent=19 // pred_check_branch
          %272 = sbr.rel (%p270) target = $region32
        $region31: #{tpu_custom_call.1} parent=19 // pred_region
          %s273 = sand.u32 %s26, 1
          %s274 = scalar_lea.sflag [#allocation8], %s273
          %s275 = sand.u32 %s109, 1
          %s276 = smul.addr %s275, 8
          %s277 = scalar_lea.vmem [#allocation9], %s276
          %279 = vsyncadd %s274, 0
          %s280 = smul.addr %s26, 8
          %s281 = scalar_lea.hbm %s3, %s280
          %s283 = sshll.u32 %s281, 4
          %s284 = int_to_ptr.hbm [resolvable:$true] %s283
          %s285 = sshll.u32 %s277, 4
          %s286 = int_to_ptr.vmem [resolvable:$true] %s285
          %288 = dma.hbm_to_vmem [thread:$0]  %s284, 128, %s286, %s274
        $region32: #{tpu_custom_call.1} parent=19 // pred_fallthru
          _
      $region20: #{tpu_custom_call.1} parent=5 // pred_fallthru
        _
      %p289 = scmp.le.s32.totalorder 1, %s26
      %p290 = scmp.lt.s32.totalorder %s26, 3
      %p291 = pnand %p289, %p290
      %p292 = pneg %p291
      // Predicated region
      $region33: #{tpu_custom_call.1} parent=5 // pred_check
        _
      $region34: #{tpu_custom_call.1} parent=5 // pred_check_branch
        %294 = sbr.rel (%p291) target = $region36
      $region35: #{tpu_custom_call.1} parent=5 // pred_region
        %s295 = ssub.s32 %s26, 1
        // Predicated region
        $region37: #{tpu_custom_call.1} parent=35 // pred_check
          %p296 = pneg %p47
        $region38: #{tpu_custom_call.1} parent=35 // pred_check_branch
          %298 = sbr.rel (%p296) target = $region40
        $region39: #{tpu_custom_call.1} parent=35 // pred_region
          %300 = dma.done [#allocation5], 64
        $region40: #{tpu_custom_call.1} parent=35 // pred_fallthru
          _
        %s301 = sand.u32 %s60, 1
        %s302 = scalar_lea.sflag [#allocation3], %s301
        %s303 = sand.u32 %s60, 1
        %s304 = smul.addr %s303, 8
        %s305 = scalar_lea.vmem [#allocation6], %s304
        // Predicated region
        $region41: #{tpu_custom_call.1} parent=35 // pred_check
          %p306 = pneg %p73
        $region42: #{tpu_custom_call.1} parent=35 // pred_check_branch
          %308 = sbr.rel (%p306) target = $region44
        $region43: #{tpu_custom_call.1} parent=35 // pred_region
          %310 = dma.done %s302, 128
        $region44: #{tpu_custom_call.1} parent=35 // pred_fallthru
          _
        %s311 = sand.u32 %s31, 1
        %s312 = scalar_lea.sflag [#allocation8], %s311
        %s313 = sand.u32 %s86, 1
        %s314 = smul.addr %s313, 8
        %s315 = scalar_lea.vmem [#allocation7], %s314
        // Predicated region
        $region45: #{tpu_custom_call.1} parent=35 // pred_check
          %p316 = pneg %p99
        $region46: #{tpu_custom_call.1} parent=35 // pred_check_branch
          %318 = sbr.rel (%p316) target = $region48
        $region47: #{tpu_custom_call.1} parent=35 // pred_region
          %320 = dma.done %s312, 128
        $region48: #{tpu_custom_call.1} parent=35 // pred_fallthru
          _
        %s321 = sand.u32 %s31, 1
        %s322 = scalar_lea.sflag [#allocation8], %s321
        %s323 = sand.u32 %s112, 1
        %s324 = smul.addr %s323, 8
        %s325 = scalar_lea.vmem [#allocation9], %s324
        // Predicated region
        $region49: #{tpu_custom_call.1} parent=35 // pred_check
          %p326 = pneg %p125
        $region50: #{tpu_custom_call.1} parent=35 // pred_check_branch
          %328 = sbr.rel (%p326) target = $region52
        $region51: #{tpu_custom_call.1} parent=35 // pred_region
          %330 = dma.done %s322, 128
        $region52: #{tpu_custom_call.1} parent=35 // pred_fallthru
          _
        %331 = sfence
        %p332 = pneg %p47
        %p333 = pneg %p44
        %s334 = sand.u32 %s60, 1
        %s335 = scalar_lea.sflag [#allocation3], %s334
        %s336 = sand.u32 %s60, 1
        %s337 = smul.addr %s336, 8
        %s338 = scalar_lea.vmem [#allocation6], %s337
        %p339 = pneg %p73
        %p340 = pneg %p70
        %s341 = sand.u32 %s31, 1
        %s342 = scalar_lea.sflag [#allocation8], %s341
        %s343 = sand.u32 %s86, 1
        %s344 = smul.addr %s343, 8
        %s345 = scalar_lea.vmem [#allocation7], %s344
        %p346 = pneg %p99
        %p347 = pneg %p96
        %s348 = sand.u32 %s31, 1
        %s349 = scalar_lea.sflag [#allocation8], %s348
        %s350 = sand.u32 %s112, 1
        %s351 = smul.addr %s350, 8
        %s352 = scalar_lea.vmem [#allocation9], %s351
        %p353 = pneg %p125
        %p354 = pneg %p122
        %p355 = pneg %p151
        %p356 = pneg %p148
        %s357 = sand.u32 %s138, 1
        %s358 = scalar_lea.sflag [#allocation4], %s357
        %s359 = sand.u32 %s138, 1
        %s360 = smul.addr %s359, 8
        %s361 = scalar_lea.vmem [#allocation10], %s360
        %p362 = pneg %p177
        %p363 = pneg %p174
        %s364 = sand.u32 %s31, 1
        %s365 = scalar_lea.sflag [#allocation12], %s364
        %s366 = sand.u32 %s164, 1
        %s367 = smul.addr %s366, 8
        %s368 = scalar_lea.vmem [#allocation11], %s367
        %p369 = pneg %p203
        %p370 = pneg %p200
        %s371 = sand.u32 %s31, 1
        %s372 = scalar_lea.sflag [#allocation12], %s371
        %s373 = sand.u32 %s190, 1
        %s374 = smul.addr %s373, 8
        %s375 = scalar_lea.vmem [#allocation13], %s374
        %v376 = vld [vmem:[%s305] sm:$0xff]
        %vm377 = vcmp.gt.f32.partialorder %v376, 0.0
        %v378 = vld [vmem:[%s315] sm:$0xff]
        %vm379 = vcmp.gt.f32.partialorder %v378, 0.0
        %v380 = vld [vmem:[%s325] sm:$0xff]
        %vm381 = vcmp.gt.f32.partialorder %v380, 0.0
        %s382 = sld [smem:[#allocation2]]
        %s383 = sld [smem:[#allocation2 + $0x1]]
        %s384 = sld [smem:[#allocation2 + $0x2]]
        %s385 = sld [smem:[#allocation2 + $0x3]]
        %s386 = sld [smem:[#allocation2 + $0x4]]
        %s387 = sld [smem:[#allocation2 + $0x5]]
        %s388 = sld [smem:[#allocation2 + $0x6]]
        %s389 = sld [smem:[#allocation2 + $0x7]]
        %s390 = sld [smem:[#allocation2 + $0x80]]
        %s391 = sld [smem:[#allocation2 + $0x81]]
        %s392 = sld [smem:[#allocation2 + $0x82]]
        %s393 = sld [smem:[#allocation2 + $0x83]]
        %s394 = sld [smem:[#allocation2 + $0x84]]
        %s395 = sld [smem:[#allocation2 + $0x85]]
        %s396 = sld [smem:[#allocation2 + $0x86]]
        %s397 = sld [smem:[#allocation2 + $0x87]]
        %s398 = sld [smem:[#allocation2 + $0x100]]
        %s399 = sld [smem:[#allocation2 + $0x101]]
        %s400 = sld [smem:[#allocation2 + $0x102]]
        %s401 = sld [smem:[#allocation2 + $0x103]]
        %s402 = sld [smem:[#allocation2 + $0x104]]
        %s403 = sld [smem:[#allocation2 + $0x105]]
        %s404 = sld [smem:[#allocation2 + $0x106]]
        %s405 = sld [smem:[#allocation2 + $0x107]]
        %v406 = vstv %s385
        %v407 = vstv %s384
        %v408 = vsel %vm379, %v406, %v407
        %v409 = vstv %s383
        %v410 = vstv %s382
        %v411 = vsel %vm379, %v409, %v410
        %v412 = vsel %vm381, %v408, %v411
        %v413 = vstv %s389
        %v414 = vstv %s388
        %v415 = vsel %vm379, %v413, %v414
        %v416 = vstv %s387
        %v417 = vstv %s386
        %v418 = vsel %vm379, %v416, %v417
        %v419 = vsel %vm381, %v415, %v418
        %v420 = vsel %vm377, %v419, %v412
        %421 = vst [vmem:[%s361] sm:$0xff] %v420
        %v422 = vstv %s393
        %v423 = vstv %s392
        %v424 = vsel %vm377, %v422, %v423
        %v425 = vstv %s391
        %v426 = vstv %s390
        %v427 = vsel %vm377, %v425, %v426
        %v428 = vsel %vm381, %v424, %v427
        %v429 = vstv %s397
        %v430 = vstv %s396
        %v431 = vsel %vm377, %v429, %v430
        %v432 = vstv %s395
        %v433 = vstv %s394
        %v434 = vsel %vm377, %v432, %v433
        %v435 = vsel %vm381, %v431, %v434
        %v436 = vsel %vm379, %v435, %v428
        %437 = vst [vmem:[%s368] sm:$0xff] %v436
        %v438 = vstv %s401
        %v439 = vstv %s400
        %v440 = vsel %vm377, %v438, %v439
        %v441 = vstv %s399
        %v442 = vstv %s398
        %v443 = vsel %vm377, %v441, %v442
        %v444 = vsel %vm379, %v440, %v443
        %v445 = vstv %s405
        %v446 = vstv %s404
        %v447 = vsel %vm377, %v445, %v446
        %v448 = vstv %s403
        %v449 = vstv %s402
        %v450 = vsel %vm377, %v448, %v449
        %v451 = vsel %vm379, %v447, %v450
        %v452 = vsel %vm381, %v451, %v444
        %453 = vst [vmem:[%s375] sm:$0xff] %v452
        %s454 = sand.u32 %s138, 1
        %s455 = scalar_lea.sflag [#allocation4], %s454
        %s456 = sand.u32 %s138, 1
        %s457 = smul.addr %s456, 8
        %s458 = scalar_lea.vmem [#allocation10], %s457
        %s459 = sand.u32 %s31, 1
        %s460 = scalar_lea.sflag [#allocation12], %s459
        %s461 = sand.u32 %s164, 1
        %s462 = smul.addr %s461, 8
        %s463 = scalar_lea.vmem [#allocation11], %s462
        %s464 = sand.u32 %s31, 1
        %s465 = scalar_lea.sflag [#allocation12], %s464
        %s466 = sand.u32 %s190, 1
        %s467 = smul.addr %s466, 8
        %s468 = scalar_lea.vmem [#allocation13], %s467
        // Predicated region
        $region53: #{tpu_custom_call.1} parent=35 // pred_check
          %p469 = pneg %p148
        $region54: #{tpu_custom_call.1} parent=35 // pred_check_branch
          %471 = sbr.rel (%p469) target = $region56
        $region55: #{tpu_custom_call.1} parent=35 // pred_region
          %473 = vsyncadd %s455, 0
          %s474 = smul.addr %s31, 8
          %s475 = scalar_lea.hbm %s4, %s474
          %s477 = sshll.u32 %s458, 4
          %s478 = int_to_ptr.vmem [resolvable:$true] %s477
          %s479 = sshll.u32 %s475, 4
          %s480 = int_to_ptr.hbm [resolvable:$true] %s479
          %482 = dma.vmem_to_hbm [thread:$0]  %s478, 128, %s480, %s455
        $region56: #{tpu_custom_call.1} parent=35 // pred_fallthru
          _
        // Predicated region
        $region57: #{tpu_custom_call.1} parent=35 // pred_check
          %p483 = pneg %p174
        $region58: #{tpu_custom_call.1} parent=35 // pred_check_branch
          %485 = sbr.rel (%p483) target = $region60
        $region59: #{tpu_custom_call.1} parent=35 // pred_region
          %487 = vsyncadd %s460, 0
          %s488 = smul.addr %s31, 8
          %s489 = scalar_lea.hbm %s5, %s488
          %s491 = sshll.u32 %s463, 4
          %s492 = int_to_ptr.vmem [resolvable:$true] %s491
          %s493 = sshll.u32 %s489, 4
          %s494 = int_to_ptr.hbm [resolvable:$true] %s493
          %496 = dma.vmem_to_hbm [thread:$0]  %s492, 128, %s494, %s460
        $region60: #{tpu_custom_call.1} parent=35 // pred_fallthru
          _
        // Predicated region
        $region61: #{tpu_custom_call.1} parent=35 // pred_check
          %p497 = pneg %p200
        $region62: #{tpu_custom_call.1} parent=35 // pred_check_branch
          %499 = sbr.rel (%p497) target = $region64
        $region63: #{tpu_custom_call.1} parent=35 // pred_region
          %501 = vsyncadd %s465, 0
          %s502 = smul.addr %s31, 8
          %s503 = scalar_lea.hbm %s6, %s502
          %s505 = sshll.u32 %s468, 4
          %s506 = int_to_ptr.vmem [resolvable:$true] %s505
          %s507 = sshll.u32 %s503, 4
          %s508 = int_to_ptr.hbm [resolvable:$true] %s507
          %510 = dma.vmem_to_hbm [thread:$0]  %s506, 128, %s508, %s465
        $region64: #{tpu_custom_call.1} parent=35 // pred_fallthru
          _
      $region36: #{tpu_custom_call.1} parent=5 // pred_fallthru
        _
      %p511 = scmp.le.s32.totalorder 2, %s26
      // Predicated region
      $region65: #{tpu_custom_call.1} parent=5 // pred_check
        %p512 = pneg %p511
      $region66: #{tpu_custom_call.1} parent=5 // pred_check_branch
        %514 = sbr.rel (%p512) target = $region68
      $region67: #{tpu_custom_call.1} parent=5 // pred_region
        %s515 = ssub.s32 %s26, 2
        // Predicated region
        $region69: #{tpu_custom_call.1} parent=67 // pred_check
          %p516 = pneg %p154
        $region70: #{tpu_custom_call.1} parent=67 // pred_check_branch
          %518 = sbr.rel (%p516) target = $region72
        $region71: #{tpu_custom_call.1} parent=67 // pred_region
          %s519 = sand.u32 %s139, 1
          %s520 = scalar_lea.sflag [#allocation4], %s519
          %s521 = sand.u32 %s139, 1
          %s522 = smul.addr %s521, 8
          %s523 = scalar_lea.vmem [#allocation10], %s522
          %525 = dma.done %s520, 128
        $region72: #{tpu_custom_call.1} parent=67 // pred_fallthru
          _
        // Predicated region
        $region73: #{tpu_custom_call.1} parent=67 // pred_check
          %p526 = pneg %p180
        $region74: #{tpu_custom_call.1} parent=67 // pred_check_branch
          %528 = sbr.rel (%p526) target = $region76
        $region75: #{tpu_custom_call.1} parent=67 // pred_region
          %s529 = sand.u32 %s32, 1
          %s530 = scalar_lea.sflag [#allocation12], %s529
          %s531 = sand.u32 %s165, 1
          %s532 = smul.addr %s531, 8
          %s533 = scalar_lea.vmem [#allocation11], %s532
          %535 = dma.done %s530, 128
        $region76: #{tpu_custom_call.1} parent=67 // pred_fallthru
          _
        // Predicated region
        $region77: #{tpu_custom_call.1} parent=67 // pred_check
          %p536 = pneg %p206
        $region78: #{tpu_custom_call.1} parent=67 // pred_check_branch
          %538 = sbr.rel (%p536) target = $region80
        $region79: #{tpu_custom_call.1} parent=67 // pred_region
          %s539 = sand.u32 %s32, 1
          %s540 = scalar_lea.sflag [#allocation12], %s539
          %s541 = sand.u32 %s191, 1
          %s542 = smul.addr %s541, 8
          %s543 = scalar_lea.vmem [#allocation13], %s542
          %545 = dma.done %s540, 128
        $region80: #{tpu_custom_call.1} parent=67 // pred_fallthru
          _
      $region68: #{tpu_custom_call.1} parent=5 // pred_fallthru
        _
    $region6: #{tpu_custom_call.1} parent=1 // loop_footer
      %s30 = sadd.s32 1, %s26
    $region7: #{tpu_custom_call.1} parent=1 // loop_footer_branch
      %25 = sbr.rel target = $region3
    $region8: #{tpu_custom_call.1} parent=1 // loop_exit
      _
    %546 = vsyncpa [#allocation3], 1
    %s547 = scalar_lea.sflag [#allocation3], 1
    %548 = vsyncpa %s547, 1
    %549 = vsyncpa [#allocation8], 1
    %s550 = scalar_lea.sflag [#allocation8], 1
    %551 = vsyncpa %s550, 1
    %552 = vsyncpa [#allocation4], 1
    %s553 = scalar_lea.sflag [#allocation4], 1
    %554 = vsyncpa %s553, 1
    %555 = vsyncpa [#allocation12], 1
    %s556 = scalar_lea.sflag [#allocation12], 1
    %557 = vsyncpa %s556, 1
    %558 = vsyncpa [#allocation5], 1
    %s559 = scalar_lea.sflag [#allocation5], 1
    %560 = vsyncpa %s559, 1

</llo_original>
